<compile_context>
chip_gen: v7x
topology: tpu7x:2x2x1
jax: 0.10.0
libtpu: 0.0.40
codegen_flags: <defaults>
</compile_context>

<pallas_src>
import functools

import jax
import jax.numpy as jnp
from jax.experimental import pallas as pl
from jax.experimental.pallas import tpu as pltpu

HIDDEN = 128
OUT_W = 128  # lane-dense output slab width


def _round_up(n, m):
    return -(-n // m) * m


def _actor_critic_kernel(x_ref, w1_ref, b1_ref, w2_ref, b2_ref,
                         wh_ref, bh_ref, out_ref, *, action_dim,
                         bf16_elementwise):
    # fc1 + ReLU  (bf16 MXU inputs, f32 accumulation)
    x = x_ref[...].astype(jnp.bfloat16)
    acc1 = jnp.dot(x, w1_ref[...], preferred_element_type=jnp.float32)
    if bf16_elementwise:
        # v6e/v7x: native bf16 VPU -> packed vregs, half the VALU ops.
        h1 = jnp.maximum(acc1.astype(jnp.bfloat16)
                         + b1_ref[...].astype(jnp.bfloat16), 0.0)
    else:
        # v5e: no bf16 VALU -> keep elementwise math in f32.
        h1 = jnp.maximum(acc1 + b1_ref[...], 0.0).astype(jnp.bfloat16)

    # fc2 + ReLU
    acc2 = jnp.dot(h1, w2_ref[...], preferred_element_type=jnp.float32)
    if bf16_elementwise:
        h2 = jnp.maximum(acc2.astype(jnp.bfloat16)
                         + b2_ref[...].astype(jnp.bfloat16), 0.0)
    else:
        h2 = jnp.maximum(acc2 + b2_ref[...], 0.0).astype(jnp.bfloat16)

    # fused heads: one matmul produces [TB, OUT_W] with
    #   lanes [0, action_dim)      -> actor logits
    #   lane  action_dim           -> critic value
    #   lanes (action_dim, OUT_W)  -> zero padding
    head = jnp.dot(h2, wh_ref[...], preferred_element_type=jnp.float32) + bh_ref[...]

    lane = jax.lax.broadcasted_iota(jnp.int32, head.shape, dimension=1)
    is_logit = lane < action_dim
    is_value = lane == action_dim

    # masked, numerically-stable softmax over the logit lanes only.
    # exp is taken on the masked tensor: non-logit lanes hold -1e30 and
    # underflow to exactly 0 (no second select, no +inf hazard).
    masked = jnp.where(is_logit, head, jnp.float32(-1e30))
    m = jnp.max(masked, axis=-1, keepdims=True)
    e = jnp.exp(masked - m)
    denom = jnp.sum(e, axis=-1, keepdims=True)
    probs = e * pl.reciprocal(denom, approx=True)

    # lane-dense slab: probs in logit lanes, raw value in the value lane,
    # zeros elsewhere -> single unmasked store per row.
    out = probs + jnp.where(is_value, head, 0.0)
    out_ref[...] = out.astype(out_ref.dtype)


def prepare_params(params, action_dim):
    """One-time param prep: transpose to [in, out], fuse + pad heads, cast to bf16."""
    hidden = params["fc1_w"].shape[0]
    w1 = params["fc1_w"].T.astype(jnp.bfloat16)          # [in, 128]
    w2 = params["fc2_w"].T.astype(jnp.bfloat16)          # [128, 128]
    b1 = params["fc1_b"][None, :].astype(jnp.float32)    # [1, 128]
    b2 = params["fc2_b"][None, :].astype(jnp.float32)    # [1, 128]

    # fused + zero-padded heads: [128, OUT_W], [1, OUT_W]
    wh = jnp.zeros((hidden, OUT_W), jnp.float32)
    wh = wh.at[:, :action_dim].set(params["actor_w"].T)
    wh = wh.at[:, action_dim:action_dim + 1].set(params["critic_w"].T)
    wh = wh.astype(jnp.bfloat16)

    bh = jnp.zeros((1, OUT_W), jnp.float32)
    bh = bh.at[0, :action_dim].set(params["actor_b"])
    bh = bh.at[0, action_dim].set(params["critic_b"][0])

    return dict(w1=w1, b1=b1, w2=w2, b2=b2, wh=wh, bh=bh)


def _default_bf16_elementwise():
    """bf16 VALU is native on v6e/v7x; keep f32 elementwise on v5e/older/unknown."""
    try:
        kind = jax.devices()[0].device_kind.lower()
    except Exception:
        return False
    return any(tok in kind for tok in ("v6", "v7", "7x"))


def _tile_and_grid(batch, block_b):
    """Pick batch tile + grid steps.

    - pad rows to a multiple of 8 (sublane constraint)
    - single step if everything fits in one tile
    - otherwise force an EVEN number of steps so v7x's two TensorCores both
      get work under dimension_semantics=("parallel",).
    """
    p = _round_up(batch, 8)
    if p <= block_b:
        return p, 1
    steps = -(-p // block_b)
    if steps % 2:
        steps += 1
    tb = _round_up(-(-p // steps), 8)
    return tb, steps


def actor_critic_forward(x, prep, action_dim, *, block_b=1024,
                         out_dtype=jnp.float32, bf16_elementwise=None):
    """x: [B, input_dim] f32. prep: output of prepare_params().

    Returns (action_probs [B, action_dim], state_value [B, 1]).
    """
    B, input_dim = x.shape
    if bf16_elementwise is None:
        bf16_elementwise = _default_bf16_elementwise()

    tb, steps = _tile_and_grid(B, block_b)
    pB = tb * steps
    if pB != B:
        x = jnp.pad(x, ((0, pB - B), (0, 0)))

    flops = 2 * pB * (input_dim * HIDDEN + HIDDEN * HIDDEN + HIDDEN * OUT_W)
    bytes_accessed = (pB * input_dim * 4
                      + sum(int(v.size) * v.dtype.itemsize for v in prep.values())
                      + pB * OUT_W * jnp.dtype(out_dtype).itemsize)
    cost = pl.CostEstimate(flops=flops, transcendentals=pB * OUT_W,
                           bytes_accessed=bytes_accessed)

    kernel = functools.partial(_actor_critic_kernel, action_dim=action_dim,
                               bf16_elementwise=bf16_elementwise)

    def run(single_buffer_weights):
        # block-invariant weights/biases: constant index_map keeps them
        # resident; Buffered(1) drops the unnecessary second VMEM copy.
        wkw = ({"pipeline_mode": pl.Buffered(1)}
               if single_buffer_weights else {})
        wspec = lambda a: pl.BlockSpec(a.shape, lambda i: (0, 0), **wkw)
        return pl.pallas_call(
            kernel,
            out_shape=jax.ShapeDtypeStruct((pB, OUT_W), out_dtype),
            grid=(steps,),
            in_specs=[
                pl.BlockSpec((tb, input_dim), lambda i: (i, 0)),  # x: batch-tiled
                wspec(prep["w1"]), wspec(prep["b1"]),
                wspec(prep["w2"]), wspec(prep["b2"]),
                wspec(prep["wh"]), wspec(prep["bh"]),
            ],
            out_specs=pl.BlockSpec((tb, OUT_W), lambda i: (i, 0)),  # lane-dense slab
            compiler_params=pltpu.CompilerParams(
                dimension_semantics=("parallel",)),
            cost_estimate=cost,
        )(x, prep["w1"], prep["b1"], prep["w2"], prep["b2"],
          prep["wh"], prep["bh"])

    try:
        out = run(True)
    except Exception:
        # Installed JAX rejected the single-buffer hint; run without it.
        out = run(False)

    probs = out[:B, :action_dim].astype(jnp.float32)
    value = out[:B, action_dim:action_dim + 1].astype(jnp.float32)
    return probs, value


def init_params(key, input_dim, action_dim, hidden=HIDDEN):
    """Deterministic synthetic init matching the nn.Module parameter shapes."""
    ks = jax.random.split(key, 8)

    def lin(kw, kb, fan_in, fan_out):
        bound = 1.0 / jnp.sqrt(fan_in)
        w = jax.random.uniform(kw, (fan_out, fan_in), jnp.float32, -bound, bound)
        b = jax.random.uniform(kb, (fan_out,), jnp.float32, -bound, bound)
        return w, b

    fc1_w, fc1_b = lin(ks[0], ks[1], input_dim, hidden)
    fc2_w, fc2_b = lin(ks[2], ks[3], hidden, hidden)
    actor_w, actor_b = lin(ks[4], ks[5], hidden, action_dim)
    critic_w, critic_b = lin(ks[6], ks[7], hidden, 1)
    return dict(fc1_w=fc1_w, fc1_b=fc1_b, fc2_w=fc2_w, fc2_b=fc2_b,
                actor_w=actor_w, actor_b=actor_b,
                critic_w=critic_w, critic_b=critic_b)


def _reference_f32(x, params):
    """Pure-JAX f32 reference (module semantics)."""
    h1 = jnp.maximum(x @ params["fc1_w"].T + params["fc1_b"], 0.0)
    h2 = jnp.maximum(h1 @ params["fc2_w"].T + params["fc2_b"], 0.0)
    logits = h2 @ params["actor_w"].T + params["actor_b"]
    probs = jax.nn.softmax(logits, axis=-1)
    value = h2 @ params["critic_w"].T + params["critic_b"]
    return probs, value


def _reference_kernel_math(x, params, action_dim, bf16_elementwise):
    """Reference mirroring the kernel's bf16-matmul / elementwise numerics."""
    bf = jnp.bfloat16
    dot = lambda a, w: jnp.dot(a.astype(bf), w.T.astype(bf),
                               preferred_element_type=jnp.float32)
    acc1 = dot(x, params["fc1_w"])
    if bf16_elementwise:
        h1 = jnp.maximum(acc1.astype(bf) + params["fc1_b"].astype(bf), 0.0)
    else:
        h1 = jnp.maximum(acc1 + params["fc1_b"], 0.0)
    acc2 = dot(h1, params["fc2_w"])
    if bf16_elementwise:
        h2 = jnp.maximum(acc2.astype(bf) + params["fc2_b"].astype(bf), 0.0)
    else:
        h2 = jnp.maximum(acc2 + params["fc2_b"], 0.0)
    logits = dot(h2, params["actor_w"]) + params["actor_b"]
    probs = jax.nn.softmax(logits, axis=-1)
    value = dot(h2, params["critic_w"]) + params["critic_b"]
    return probs, value


if __name__ == "__main__":
    key = jax.random.PRNGKey(0)
    k_x, k_p, k_x2 = jax.random.split(key, 3)

    B, INPUT_DIM, ACTION_DIM = 8, 32, 8
    x = jax.random.normal(k_x, (B, INPUT_DIM), jnp.float32)
    params = init_params(k_p, INPUT_DIM, ACTION_DIM)

    prep = prepare_params(params, ACTION_DIM)   # one-time prep, out of hot path
    bf16_ew = _default_bf16_elementwise()

    # --- small batch (single tile, no padding) ------------------------------
    probs, value = actor_critic_forward(x, prep, ACTION_DIM,
                                        bf16_elementwise=bf16_ew)
    probs = jax.block_until_ready(probs)
    value = jax.block_until_ready(value)
    assert probs.shape == (B, ACTION_DIM) and value.shape == (B, 1)

    # Tight check against a reference mirroring the kernel's numerics
    # (approx-reciprocal softmax adds ~1e-3-level drift).
    kp, kv = _reference_kernel_math(x, params, ACTION_DIM, bf16_ew)
    assert jnp.allclose(probs, kp, atol=5e-3, rtol=5e-3)
    assert jnp.allclose(value, kv, atol=5e-3, rtol=5e-3)

    # Looser check against the full-f32 module semantics.
    fp, fv = _reference_f32(x, params)
    assert jnp.allclose(probs, fp, atol=5e-2, rtol=5e-2)
    assert jnp.allclose(value, fv, atol=5e-2, rtol=5e-2)
    assert jnp.allclose(jnp.sum(probs, axis=-1), 1.0, atol=5e-3)

    # --- multi-tile path (padding + even grid split for v7x dual-TC) --------
    B2 = 200
    x2 = jax.random.normal(k_x2, (B2, INPUT_DIM), jnp.float32)
    p2, v2 = actor_critic_forward(x2, prep, ACTION_DIM, block_b=64,
                                  bf16_elementwise=bf16_ew)
    p2 = jax.block_until_ready(p2)
    v2 = jax.block_until_ready(v2)
    assert p2.shape == (B2, ACTION_DIM) and v2.shape == (B2, 1)
    kp2, kv2 = _reference_kernel_math(x2, params, ACTION_DIM, bf16_ew)
    assert jnp.allclose(p2, kp2, atol=5e-3, rtol=5e-3)
    assert jnp.allclose(v2, kv2, atol=5e-3, rtol=5e-3)
    assert jnp.allclose(jnp.sum(p2, axis=-1), 1.0, atol=5e-3)

    print("KERNEL_OK")
</pallas_src>

<mosaic_0001>
module attributes {stable_mosaic.version = 11 : i64} {
  func.func @_actor_critic_kernel(%arg0: i32, %arg1: memref<8x32xf32, #tpu.memory_space<vmem>>, %arg2: memref<32x128xbf16, #tpu.memory_space<vmem>>, %arg3: memref<1x128xf32, #tpu.memory_space<vmem>>, %arg4: memref<128x128xbf16, #tpu.memory_space<vmem>>, %arg5: memref<1x128xf32, #tpu.memory_space<vmem>>, %arg6: memref<128x128xbf16, #tpu.memory_space<vmem>>, %arg7: memref<1x128xf32, #tpu.memory_space<vmem>>, %arg8: memref<8x128xf32, #tpu.memory_space<vmem>>) attributes {dimension_semantics = [#tpu.dimension_semantics<parallel>], iteration_bounds = array<i64: 1>, scalar_prefetch = 0 : i64, scratch_operands = 0 : i64, tpu.core_type = #tpu.core_type<tc>, window_params = [{transform_indices = @transform_0, window_bounds = array<i64: 8, 32>}, {pipeline_mode = #tpu.pipeline_mode<synchronous>, transform_indices = @transform_1, window_bounds = array<i64: 32, 128>}, {pipeline_mode = #tpu.pipeline_mode<synchronous>, transform_indices = @transform_2, window_bounds = array<i64: 1, 128>}, {pipeline_mode = #tpu.pipeline_mode<synchronous>, transform_indices = @transform_3, window_bounds = array<i64: 128, 128>}, {pipeline_mode = #tpu.pipeline_mode<synchronous>, transform_indices = @transform_4, window_bounds = array<i64: 1, 128>}, {pipeline_mode = #tpu.pipeline_mode<synchronous>, transform_indices = @transform_5, window_bounds = array<i64: 128, 128>}, {pipeline_mode = #tpu.pipeline_mode<synchronous>, transform_indices = @transform_6, window_bounds = array<i64: 1, 128>}, {transform_indices = @transform_7, window_bounds = array<i64: 8, 128>}]} {
    %c0 = arith.constant 0 : index
    %c0_0 = arith.constant 0 : index
    %0 = vector.load %arg1[%c0, %c0_0] : memref<8x32xf32, #tpu.memory_space<vmem>>, vector<8x32xf32>
    %1 = arith.truncf %0 : vector<8x32xf32> to vector<8x32xbf16>
    %c0_1 = arith.constant 0 : index
    %c0_2 = arith.constant 0 : index
    %2 = vector.load %arg2[%c0_1, %c0_2] : memref<32x128xbf16, #tpu.memory_space<vmem>>, vector<32x128xbf16>
    %cst = arith.constant dense<0.000000e+00> : vector<8x128xf32>
    %3 = tpu.matmul %1, %2, %cst {dimension_numbers = #tpu.dot_dimension_numbers<[1], [0], [0], [1], [0, 0, 1, 1], [], []>} : vector<8x32xbf16>, vector<32x128xbf16>, vector<8x128xf32> -> vector<8x128xf32>
    %c0_3 = arith.constant 0 : index
    %c0_4 = arith.constant 0 : index
    %4 = vector.load %arg3[%c0_3, %c0_4] : memref<1x128xf32, #tpu.memory_space<vmem>>, vector<1x128xf32>
    %5 = vector.broadcast %4 : vector<1x128xf32> to vector<8x128xf32>
    %6 = arith.addf %3, %5 : vector<8x128xf32>
    %cst_5 = arith.constant 0.000000e+00 : f32
    %7 = vector.broadcast %cst_5 : f32 to vector<8x128xf32>
    %8 = arith.maximumf %6, %7 : vector<8x128xf32>
    %9 = arith.truncf %8 : vector<8x128xf32> to vector<8x128xbf16>
    %c0_6 = arith.constant 0 : index
    %c0_7 = arith.constant 0 : index
    %10 = vector.load %arg4[%c0_6, %c0_7] : memref<128x128xbf16, #tpu.memory_space<vmem>>, vector<128x128xbf16>
    %cst_8 = arith.constant dense<0.000000e+00> : vector<8x128xf32>
    %11 = tpu.matmul %9, %10, %cst_8 {dimension_numbers = #tpu.dot_dimension_numbers<[1], [0], [0], [1], [0, 0, 1, 1], [], []>} : vector<8x128xbf16>, vector<128x128xbf16>, vector<8x128xf32> -> vector<8x128xf32>
    %c0_9 = arith.constant 0 : index
    %c0_10 = arith.constant 0 : index
    %12 = vector.load %arg5[%c0_9, %c0_10] : memref<1x128xf32, #tpu.memory_space<vmem>>, vector<1x128xf32>
    %13 = vector.broadcast %12 : vector<1x128xf32> to vector<8x128xf32>
    %14 = arith.addf %11, %13 : vector<8x128xf32>
    %cst_11 = arith.constant 0.000000e+00 : f32
    %15 = vector.broadcast %cst_11 : f32 to vector<8x128xf32>
    %16 = arith.maximumf %14, %15 : vector<8x128xf32>
    %17 = arith.truncf %16 : vector<8x128xf32> to vector<8x128xbf16>
    %c0_12 = arith.constant 0 : index
    %c0_13 = arith.constant 0 : index
    %18 = vector.load %arg6[%c0_12, %c0_13] : memref<128x128xbf16, #tpu.memory_space<vmem>>, vector<128x128xbf16>
    %cst_14 = arith.constant dense<0.000000e+00> : vector<8x128xf32>
    %19 = tpu.matmul %17, %18, %cst_14 {dimension_numbers = #tpu.dot_dimension_numbers<[1], [0], [0], [1], [0, 0, 1, 1], [], []>} : vector<8x128xbf16>, vector<128x128xbf16>, vector<8x128xf32> -> vector<8x128xf32>
    %c0_15 = arith.constant 0 : index
    %c0_16 = arith.constant 0 : index
    %20 = vector.load %arg7[%c0_15, %c0_16] : memref<1x128xf32, #tpu.memory_space<vmem>>, vector<1x128xf32>
    %21 = vector.broadcast %20 : vector<1x128xf32> to vector<8x128xf32>
    %22 = arith.addf %19, %21 : vector<8x128xf32>
    %23 = tpu.iota {dimensions = array<i32: 1>} : vector<8x128xi32>
    %c8_i32 = arith.constant 8 : i32
    %24 = vector.broadcast %c8_i32 : i32 to vector<8x128xi32>
    %25 = arith.cmpi slt, %23, %24 : vector<8x128xi32>
    %c8_i32_17 = arith.constant 8 : i32
    %26 = vector.broadcast %c8_i32_17 : i32 to vector<8x128xi32>
    %27 = arith.cmpi eq, %23, %26 : vector<8x128xi32>
    %cst_18 = arith.constant -1.000000e+30 : f32
    %28 = vector.broadcast %cst_18 : f32 to vector<8x128xf32>
    %29 = arith.select %25, %22, %28 : vector<8x128xi1>, vector<8x128xf32>
    %cst_19 = arith.constant dense<0xFF800000> : vector<8xf32>
    %30 = vector.multi_reduction <maximumf>, %29, %cst_19 [1] : vector<8x128xf32> to vector<8xf32>
    %31 = vector.shape_cast %30 : vector<8xf32> to vector<8x1xf32>
    %32 = vector.broadcast %31 : vector<8x1xf32> to vector<8x128xf32>
    %33 = arith.subf %29, %32 : vector<8x128xf32>
    %34 = math.exp %33 : vector<8x128xf32>
    %cst_20 = arith.constant dense<0.000000e+00> : vector<8xf32>
    %35 = vector.multi_reduction <add>, %34, %cst_20 [1] : vector<8x128xf32> to vector<8xf32>
    %36 = vector.shape_cast %35 : vector<8xf32> to vector<8x1xf32>
    %37 = tpu.reciprocal %36 {approx = true} : vector<8x1xf32> -> vector<8x1xf32>
    %38 = vector.broadcast %37 : vector<8x1xf32> to vector<8x128xf32>
    %39 = arith.mulf %34, %38 : vector<8x128xf32>
    %cst_21 = arith.constant 0.000000e+00 : f32
    %40 = vector.broadcast %cst_21 : f32 to vector<8x128xf32>
    %41 = arith.select %27, %22, %40 : vector<8x128xi1>, vector<8x128xf32>
    %42 = arith.addf %39, %41 : vector<8x128xf32>
    %c0_22 = arith.constant 0 : index
    %c0_23 = arith.constant 0 : index
    %43 = vector.load %arg8[%c0_22, %c0_23] : memref<8x128xf32, #tpu.memory_space<vmem>>, vector<8x128xf32>
    tpu.vector_store %arg8[%c0_22, %c0_23], %42 {strides = array<i32>} : memref<8x128xf32, #tpu.memory_space<vmem>>, vector<8x128xf32>,
    return
  }
  func.func @transform_0(%arg0: i32) -> (i32, i32) {
    %c0_i32 = arith.constant 0 : i32
    %c0_i32_0 = arith.constant 0 : i32
    return %arg0, %c0_i32 : i32, i32
  }
  func.func @transform_1(%arg0: i32) -> (i32, i32) {
    %c0_i32 = arith.constant 0 : i32
    %c0_i32_0 = arith.constant 0 : i32
    %c0_i32_1 = arith.constant 0 : i32
    return %c0_i32, %c0_i32_0 : i32, i32
  }
  func.func @transform_2(%arg0: i32) -> (i32, i32) {
    %c0_i32 = arith.constant 0 : i32
    %c0_i32_0 = arith.constant 0 : i32
    %c0_i32_1 = arith.constant 0 : i32
    return %c0_i32, %c0_i32_0 : i32, i32
  }
  func.func @transform_3(%arg0: i32) -> (i32, i32) {
    %c0_i32 = arith.constant 0 : i32
    %c0_i32_0 = arith.constant 0 : i32
    %c0_i32_1 = arith.constant 0 : i32
    return %c0_i32, %c0_i32_0 : i32, i32
  }
  func.func @transform_4(%arg0: i32) -> (i32, i32) {
    %c0_i32 = arith.constant 0 : i32
    %c0_i32_0 = arith.constant 0 : i32
    %c0_i32_1 = arith.constant 0 : i32
    return %c0_i32, %c0_i32_0 : i32, i32
  }
  func.func @transform_5(%arg0: i32) -> (i32, i32) {
    %c0_i32 = arith.constant 0 : i32
    %c0_i32_0 = arith.constant 0 : i32
    %c0_i32_1 = arith.constant 0 : i32
    return %c0_i32, %c0_i32_0 : i32, i32
  }
  func.func @transform_6(%arg0: i32) -> (i32, i32) {
    %c0_i32 = arith.constant 0 : i32
    %c0_i32_0 = arith.constant 0 : i32
    %c0_i32_1 = arith.constant 0 : i32
    return %c0_i32, %c0_i32_0 : i32, i32
  }
  func.func @transform_7(%arg0: i32) -> (i32, i32) {
    %c0_i32 = arith.constant 0 : i32
    %c0_i32_0 = arith.constant 0 : i32
    return %arg0, %c0_i32 : i32, i32
  }
}

module attributes {stable_mosaic.version = 11 : i64} {
  func.func @_actor_critic_kernel(%arg0: i32, %arg1: memref<8x32xf32, #tpu.memory_space<vmem>>, %arg2: memref<32x128xbf16, #tpu.memory_space<vmem>>, %arg3: memref<1x128xf32, #tpu.memory_space<vmem>>, %arg4: memref<128x128xbf16, #tpu.memory_space<vmem>>, %arg5: memref<1x128xf32, #tpu.memory_space<vmem>>, %arg6: memref<128x128xbf16, #tpu.memory_space<vmem>>, %arg7: memref<1x128xf32, #tpu.memory_space<vmem>>, %arg8: memref<8x128xf32, #tpu.memory_space<vmem>>) attributes {dimension_semantics = [#tpu.dimension_semantics<parallel>], iteration_bounds = array<i64: 1>, scalar_prefetch = 0 : i64, scratch_operands = 0 : i64, tpu.core_type = #tpu.core_type<tc>, window_params = [{transform_indices = @transform_0, window_bounds = array<i64: 8, 32>}, {pipeline_mode = #tpu.pipeline_mode<synchronous>, transform_indices = @transform_1, window_bounds = array<i64: 32, 128>}, {pipeline_mode = #tpu.pipeline_mode<synchronous>, transform_indices = @transform_2, window_bounds = array<i64: 1, 128>}, {pipeline_mode = #tpu.pipeline_mode<synchronous>, transform_indices = @transform_3, window_bounds = array<i64: 128, 128>}, {pipeline_mode = #tpu.pipeline_mode<synchronous>, transform_indices = @transform_4, window_bounds = array<i64: 1, 128>}, {pipeline_mode = #tpu.pipeline_mode<synchronous>, transform_indices = @transform_5, window_bounds = array<i64: 128, 128>}, {pipeline_mode = #tpu.pipeline_mode<synchronous>, transform_indices = @transform_6, window_bounds = array<i64: 1, 128>}, {transform_indices = @transform_7, window_bounds = array<i64: 8, 128>}]} {
    %c0 = arith.constant 0 : index
    %c0_0 = arith.constant 0 : index
    %0 = vector.load %arg1[%c0, %c0_0] : memref<8x32xf32, #tpu.memory_space<vmem>>, vector<8x32xf32>
    %1 = arith.truncf %0 : vector<8x32xf32> to vector<8x32xbf16>
    %c0_1 = arith.constant 0 : index
    %c0_2 = arith.constant 0 : index
    %2 = vector.load %arg2[%c0_1, %c0_2] : memref<32x128xbf16, #tpu.memory_space<vmem>>, vector<32x128xbf16>
    %cst = arith.constant dense<0.000000e+00> : vector<8x128xf32>
    %3 = tpu.matmul %1, %2, %cst {dimension_numbers = #tpu.dot_dimension_numbers<[1], [0], [0], [1], [0, 0, 1, 1], [], []>} : vector<8x32xbf16>, vector<32x128xbf16>, vector<8x128xf32> -> vector<8x128xf32>
    %c0_3 = arith.constant 0 : index
    %c0_4 = arith.constant 0 : index
    %4 = vector.load %arg3[%c0_3, %c0_4] : memref<1x128xf32, #tpu.memory_space<vmem>>, vector<1x128xf32>
    %5 = vector.broadcast %4 : vector<1x128xf32> to vector<8x128xf32>
    %6 = arith.addf %3, %5 : vector<8x128xf32>
    %cst_5 = arith.constant 0.000000e+00 : f32
    %7 = vector.broadcast %cst_5 : f32 to vector<8x128xf32>
    %8 = arith.maximumf %6, %7 : vector<8x128xf32>
    %9 = arith.truncf %8 : vector<8x128xf32> to vector<8x128xbf16>
    %c0_6 = arith.constant 0 : index
    %c0_7 = arith.constant 0 : index
    %10 = vector.load %arg4[%c0_6, %c0_7] : memref<128x128xbf16, #tpu.memory_space<vmem>>, vector<128x128xbf16>
    %cst_8 = arith.constant dense<0.000000e+00> : vector<8x128xf32>
    %11 = tpu.matmul %9, %10, %cst_8 {dimension_numbers = #tpu.dot_dimension_numbers<[1], [0], [0], [1], [0, 0, 1, 1], [], []>} : vector<8x128xbf16>, vector<128x128xbf16>, vector<8x128xf32> -> vector<8x128xf32>
    %c0_9 = arith.constant 0 : index
    %c0_10 = arith.constant 0 : index
    %12 = vector.load %arg5[%c0_9, %c0_10] : memref<1x128xf32, #tpu.memory_space<vmem>>, vector<1x128xf32>
    %13 = vector.broadcast %12 : vector<1x128xf32> to vector<8x128xf32>
    %14 = arith.addf %11, %13 : vector<8x128xf32>
    %cst_11 = arith.constant 0.000000e+00 : f32
    %15 = vector.broadcast %cst_11 : f32 to vector<8x128xf32>
    %16 = arith.maximumf %14, %15 : vector<8x128xf32>
    %17 = arith.truncf %16 : vector<8x128xf32> to vector<8x128xbf16>
    %c0_12 = arith.constant 0 : index
    %c0_13 = arith.constant 0 : index
    %18 = vector.load %arg6[%c0_12, %c0_13] : memref<128x128xbf16, #tpu.memory_space<vmem>>, vector<128x128xbf16>
    %cst_14 = arith.constant dense<0.000000e+00> : vector<8x128xf32>
    %19 = tpu.matmul %17, %18, %cst_14 {dimension_numbers = #tpu.dot_dimension_numbers<[1], [0], [0], [1], [0, 0, 1, 1], [], []>} : vector<8x128xbf16>, vector<128x128xbf16>, vector<8x128xf32> -> vector<8x128xf32>
    %c0_15 = arith.constant 0 : index
    %c0_16 = arith.constant 0 : index
    %20 = vector.load %arg7[%c0_15, %c0_16] : memref<1x128xf32, #tpu.memory_space<vmem>>, vector<1x128xf32>
    %21 = vector.broadcast %20 : vector<1x128xf32> to vector<8x128xf32>
    %22 = arith.addf %19, %21 : vector<8x128xf32>
    %23 = tpu.iota {dimensions = array<i32: 1>} : vector<8x128xi32>
    %c8_i32 = arith.constant 8 : i32
    %24 = vector.broadcast %c8_i32 : i32 to vector<8x128xi32>
    %25 = arith.cmpi slt, %23, %24 : vector<8x128xi32>
    %c8_i32_17 = arith.constant 8 : i32
    %26 = vector.broadcast %c8_i32_17 : i32 to vector<8x128xi32>
    %27 = arith.cmpi eq, %23, %26 : vector<8x128xi32>
    %cst_18 = arith.constant -1.000000e+30 : f32
    %28 = vector.broadcast %cst_18 : f32 to vector<8x128xf32>
    %29 = arith.select %25, %22, %28 : vector<8x128xi1>, vector<8x128xf32>
    %cst_19 = arith.constant dense<0xFF800000> : vector<8xf32>
    %30 = vector.multi_reduction <maximumf>, %29, %cst_19 [1] : vector<8x128xf32> to vector<8xf32>
    %31 = vector.shape_cast %30 : vector<8xf32> to vector<8x1xf32>
    %32 = vector.broadcast %31 : vector<8x1xf32> to vector<8x128xf32>
    %33 = arith.subf %29, %32 : vector<8x128xf32>
    %34 = math.exp %33 : vector<8x128xf32>
    %cst_20 = arith.constant dense<0.000000e+00> : vector<8xf32>
    %35 = vector.multi_reduction <add>, %34, %cst_20 [1] : vector<8x128xf32> to vector<8xf32>
    %36 = vector.shape_cast %35 : vector<8xf32> to vector<8x1xf32>
    %37 = tpu.reciprocal %36 {approx = true} : vector<8x1xf32> -> vector<8x1xf32>
    %38 = vector.broadcast %37 : vector<8x1xf32> to vector<8x128xf32>
    %39 = arith.mulf %34, %38 : vector<8x128xf32>
    %cst_21 = arith.constant 0.000000e+00 : f32
    %40 = vector.broadcast %cst_21 : f32 to vector<8x128xf32>
    %41 = arith.select %27, %22, %40 : vector<8x128xi1>, vector<8x128xf32>
    %42 = arith.addf %39, %41 : vector<8x128xf32>
    %c0_22 = arith.constant 0 : index
    %c0_23 = arith.constant 0 : index
    %43 = vector.load %arg8[%c0_22, %c0_23] : memref<8x128xf32, #tpu.memory_space<vmem>>, vector<8x128xf32>
    tpu.vector_store %arg8[%c0_22, %c0_23], %42 {strides = array<i32>} : memref<8x128xf32, #tpu.memory_space<vmem>>, vector<8x128xf32>,
    return
  }
  func.func @transform_0(%arg0: i32) -> (i32, i32) {
    %c0_i32 = arith.constant 0 : i32
    %c0_i32_0 = arith.constant 0 : i32
    return %arg0, %c0_i32 : i32, i32
  }
  func.func @transform_1(%arg0: i32) -> (i32, i32) {
    %c0_i32 = arith.constant 0 : i32
    %c0_i32_0 = arith.constant 0 : i32
    %c0_i32_1 = arith.constant 0 : i32
    return %c0_i32, %c0_i32_0 : i32, i32
  }
  func.func @transform_2(%arg0: i32) -> (i32, i32) {
    %c0_i32 = arith.constant 0 : i32
    %c0_i32_0 = arith.constant 0 : i32
    %c0_i32_1 = arith.constant 0 : i32
    return %c0_i32, %c0_i32_0 : i32, i32
  }
  func.func @transform_3(%arg0: i32) -> (i32, i32) {
    %c0_i32 = arith.constant 0 : i32
    %c0_i32_0 = arith.constant 0 : i32
    %c0_i32_1 = arith.constant 0 : i32
    return %c0_i32, %c0_i32_0 : i32, i32
  }
  func.func @transform_4(%arg0: i32) -> (i32, i32) {
    %c0_i32 = arith.constant 0 : i32
    %c0_i32_0 = arith.constant 0 : i32
    %c0_i32_1 = arith.constant 0 : i32
    return %c0_i32, %c0_i32_0 : i32, i32
  }
  func.func @transform_5(%arg0: i32) -> (i32, i32) {
    %c0_i32 = arith.constant 0 : i32
    %c0_i32_0 = arith.constant 0 : i32
    %c0_i32_1 = arith.constant 0 : i32
    return %c0_i32, %c0_i32_0 : i32, i32
  }
  func.func @transform_6(%arg0: i32) -> (i32, i32) {
    %c0_i32 = arith.constant 0 : i32
    %c0_i32_0 = arith.constant 0 : i32
    %c0_i32_1 = arith.constant 0 : i32
    return %c0_i32, %c0_i32_0 : i32, i32
  }
  func.func @transform_7(%arg0: i32) -> (i32, i32) {
    %c0_i32 = arith.constant 0 : i32
    %c0_i32_0 = arith.constant 0 : i32
    return %arg0, %c0_i32 : i32, i32
  }
}

</mosaic_0001>

<llo_original>
// kernel: tpu_custom_call.1
$region0: #{tpu_custom_call.1}
  #allocation0 [shape = 'u32[]', space=smem, size = 0x4, offset = 0x4, fixed_abs, tag = 'smem constant byte address 0x4 - core index']
  #allocation1 [shape = 'u32[144,128]{1,0:T(1,128)}', space=vmem, size = 0x12000, scoped, tag = 'internal scratch']
  %s0 = inlined_call_operand.hbm [shape: f32[8,32], index: 0, kind: input, shape index: {}]
  %s1 = inlined_call_operand.hbm [shape: bf16[32,128], index: 1, kind: input, shape index: {}]
  %s2 = inlined_call_operand.vmem [shape: f32[1,128], index: 2, kind: input, shape index: {}]
  %s3 = inlined_call_operand.hbm [shape: bf16[128,128], index: 3, kind: input, shape index: {}]
  %s4 = inlined_call_operand.vmem [shape: f32[1,128], index: 4, kind: input, shape index: {}]
  %s5 = inlined_call_operand.hbm [shape: bf16[128,128], index: 5, kind: input, shape index: {}]
  %s6 = inlined_call_operand.vmem [shape: f32[1,128], index: 6, kind: input, shape index: {}]
  %s7 = inlined_call_operand.hbm [shape: f32[8,128], index: 7, kind: output, shape index: {}]
  %s8 = sld [smem:[#allocation0]]
  $region54: #{tpu_custom_call.1} parent=0
    _
  %s10 = ssub.s32 1, %s8
  %s11 = scalar_select 0, %s10, %s8
  $region1: #{tpu_custom_call.1} parent=0
    #allocation2 [shape = 'u8[4096]{0}', space=vmem, size = 0x1000, scoped, tag = 'input window, operand 0, single buffered']
    #allocation3 [shape = 's32[1]{0}', space=sflag, size = 0x4, scoped, tag = 'scoped memory for tpu_custom_call.1']
    #allocation4 [shape = 's32[1]{0}', space=sflag, size = 0x4, scoped, tag = 'scoped memory for tpu_custom_call.1']
    #allocation5 [shape = 'u8[8192]{0}', space=vmem, size = 0x2000, scoped, tag = 'input window, operand 1, single buffered']
    #allocation6 [shape = 's32[1]{0}', space=sflag, size = 0x4, scoped, tag = 'scoped memory for tpu_custom_call.1']
    #allocation7 [shape = 'u8[32768]{0}', space=vmem, size = 0x8000, scoped, tag = 'input window, operand 3, single buffered']
    #allocation8 [shape = 'u8[32768]{0}', space=vmem, size = 0x8000, scoped, tag = 'input window, operand 5, single buffered']
    #allocation9 [shape = 's32[1]{0}', space=sflag, size = 0x4, scoped, tag = 'scoped memory for tpu_custom_call.1']
    #allocation10 [shape = 'u8[4096]{0}', space=vmem, size = 0x1000, scoped, tag = 'output window, operand 0, single buffered']
    %12 = vsyncpa [#allocation3], 0
    %13 = vsyncpa [#allocation6], 0
    %14 = vsyncpa [#allocation9], 0
    %15 = vsyncpa [#allocation4], 0
    // Predicated region
    $region2: #{tpu_custom_call.1} parent=1 // pred_check
      _
    $region3: #{tpu_custom_call.1} parent=1 // pred_check_branch
      %17 = sbr.rel (0) target = $region5
    $region4: #{tpu_custom_call.1} parent=1 // pred_region
      %s19 = ssub.s32 128, 128
      %20 = vsyncadd [#allocation3], %s19
      %s22 = sshll.u32 [#allocation2], 4
      %s23 = int_to_ptr.vmem [resolvable:$true] %s22
      %25 = dma.hbm_to_vmem [thread:$0]  %s0, 128, %s23, [#allocation3]
    $region5: #{tpu_custom_call.1} parent=1 // pred_fallthru
      _
    // Predicated region
    $region6: #{tpu_custom_call.1} parent=1 // pred_check
      _
    $region7: #{tpu_custom_call.1} parent=1 // pred_check_branch
      %27 = sbr.rel (0) target = $region9
    $region8: #{tpu_custom_call.1} parent=1 // pred_region
      %s29 = ssub.s32 256, 256
      %30 = vsyncadd [#allocation6], %s29
      %s31 = sshll.u32 [#allocation5], 4
      %s32 = int_to_ptr.vmem [resolvable:$true] %s31
      %37 = dma.hbm_to_vmem [thread:$0]  %s1, 256, %s32, [#allocation6], 64, 64, 4
    $region9: #{tpu_custom_call.1} parent=1 // pred_fallthru
      _
    // Predicated region
    $region10: #{tpu_custom_call.1} parent=1 // pred_check
      _
    $region11: #{tpu_custom_call.1} parent=1 // pred_check_branch
      %39 = sbr.rel (0) target = $region13
    $region12: #{tpu_custom_call.1} parent=1 // pred_region
      _
    $region13: #{tpu_custom_call.1} parent=1 // pred_fallthru
      _
    // Predicated region
    $region14: #{tpu_custom_call.1} parent=1 // pred_check
      _
    $region15: #{tpu_custom_call.1} parent=1 // pred_check_branch
      %41 = sbr.rel (0) target = $region17
    $region16: #{tpu_custom_call.1} parent=1 // pred_region
      %s43 = ssub.s32 1024, 1024
      %44 = vsyncadd [#allocation6], %s43
      %s45 = sshll.u32 [#allocation7], 4
      %s46 = int_to_ptr.vmem [resolvable:$true] %s45
      %51 = dma.hbm_to_vmem [thread:$0]  %s3, 1024, %s46, [#allocation6], 64, 64, 4
    $region17: #{tpu_custom_call.1} parent=1 // pred_fallthru
      _
    // Predicated region
    $region18: #{tpu_custom_call.1} parent=1 // pred_check
      _
    $region19: #{tpu_custom_call.1} parent=1 // pred_check_branch
      %53 = sbr.rel (0) target = $region21
    $region20: #{tpu_custom_call.1} parent=1 // pred_region
      _
    $region21: #{tpu_custom_call.1} parent=1 // pred_fallthru
      _
    // Predicated region
    $region22: #{tpu_custom_call.1} parent=1 // pred_check
      _
    $region23: #{tpu_custom_call.1} parent=1 // pred_check_branch
      %55 = sbr.rel (0) target = $region25
    $region24: #{tpu_custom_call.1} parent=1 // pred_region
      %s57 = ssub.s32 1024, 1024
      %58 = vsyncadd [#allocation9], %s57
      %s59 = sshll.u32 [#allocation8], 4
      %s60 = int_to_ptr.vmem [resolvable:$true] %s59
      %65 = dma.hbm_to_vmem [thread:$0]  %s5, 1024, %s60, [#allocation9], 64, 64, 4
    $region25: #{tpu_custom_call.1} parent=1 // pred_fallthru
      _
    // Predicated region
    $region26: #{tpu_custom_call.1} parent=1 // pred_check
      _
    $region27: #{tpu_custom_call.1} parent=1 // pred_check_branch
      %67 = sbr.rel (0) target = $region29
    $region28: #{tpu_custom_call.1} parent=1 // pred_region
      _
    $region29: #{tpu_custom_call.1} parent=1 // pred_fallthru
      _
    // Predicated region
    $region30: #{tpu_custom_call.1} parent=1 // pred_check
      _
    $region31: #{tpu_custom_call.1} parent=1 // pred_check_branch
      %69 = sbr.rel (0) target = $region33
    $region32: #{tpu_custom_call.1} parent=1 // pred_region
      %70 = dma.done [#allocation3], 128
    $region33: #{tpu_custom_call.1} parent=1 // pred_fallthru
      _
    // Predicated region
    $region34: #{tpu_custom_call.1} parent=1 // pred_check
      _
    $region35: #{tpu_custom_call.1} parent=1 // pred_check_branch
      %72 = sbr.rel (0) target = $region37
    $region36: #{tpu_custom_call.1} parent=1 // pred_region
      %73 = dma.done [#allocation6], 256
    $region37: #{tpu_custom_call.1} parent=1 // pred_fallthru
      _
    // Predicated region
    $region38: #{tpu_custom_call.1} parent=1 // pred_check
      _
    $region39: #{tpu_custom_call.1} parent=1 // pred_check_branch
      %75 = sbr.rel (0) target = $region41
    $region40: #{tpu_custom_call.1} parent=1 // pred_region
      %76 = dma.done [#allocation6], 1024
    $region41: #{tpu_custom_call.1} parent=1 // pred_fallthru
      _
    // Predicated region
    $region42: #{tpu_custom_call.1} parent=1 // pred_check
      _
    $region43: #{tpu_custom_call.1} parent=1 // pred_check_branch
      %78 = sbr.rel (0) target = $region45
    $region44: #{tpu_custom_call.1} parent=1 // pred_region
      %79 = dma.done [#allocation9], 1024
    $region45: #{tpu_custom_call.1} parent=1 // pred_fallthru
      _
    %v81 = vld [vmem:[#allocation2] sm:$0xff]
    %v82 = vpack.c.bf16 %v81, %v81
    %v83 = vld [vmem:[#allocation5] sm:$0xf]
    %v84 = vld [vmem:[#allocation5 + $0x4] sm:$0xf]
    %v85 = vld [vmem:[#allocation5 + $0x8] sm:$0xf]
    %v86 = vld [vmem:[#allocation5 + $0xc] sm:$0xf]
    %v87 = vld [vmem:[%s2] sm:$0x1]
    %v89 = vlaneseq
    %v90 = vshrl.u32 %v89, 7
    %v91 = vsub.s32 0, %v90
    %v92 = vrot.slane %v87, %v91
    %v98 = vunpack.c.l.b16 %v83
    %v99 = vunpack.c.l.b16 %v84
    %v100 = vunpack.c.l.b16 %v85
    %v101 = vunpack.c.l.b16 %v86
    %v102 = vpack.c.b16 %v99, %v98
    %v103 = vpack.c.b16 %v101, %v100
    %vm106 = vcmask 261120
    %v108 = vsel %vm106, %v82, 0
    %110 = vmatprep.subr.bf16.mxu0 0
    %111 = vmatpush1.bf16.msra.mxu0 %v102
    %112 = vmatprep.subr.bf16.mxu0 0
    %113 = vmatpush1.bf16.msra.mxu0 %v103
    %114 = vmatprep.subr.bf16.mxu0 0
    %115 = vmatpush1.bf16.msra.mxu0 0
    %116 = vmatprep.subr.bf16.mxu0 0
    %117 = vmatpush1.bf16.msra.mxu0 0
    %118 = vmatprep.subr.bf16.mxu0 0
    %119 = vmatpush1.bf16.msra.mxu0 0
    %120 = vmatprep.subr.bf16.mxu0 0
    %121 = vmatpush1.bf16.msra.mxu0 0
    %122 = vmatprep.subr.bf16.mxu0 0
    %123 = vmatpush1.bf16.msra.mxu0 0
    %124 = vmatprep.subr.bf16.mxu0 0
    %125 = vmatpush1.bf16.msra.mxu0 0
    %126 = vmatprep.subr.bf16.mxu0 0
    %127 = vmatpush1.bf16.msra.mxu0 0
    %128 = vmatprep.subr.bf16.mxu0 0
    %129 = vmatpush1.bf16.msra.mxu0 0
    %130 = vmatprep.subr.bf16.mxu0 0
    %131 = vmatpush1.bf16.msra.mxu0 0
    %132 = vmatprep.subr.bf16.mxu0 0
    %133 = vmatpush1.bf16.msra.mxu0 0
    %134 = vmatprep.subr.bf16.mxu0 0
    %135 = vmatpush1.bf16.msra.mxu0 0
    %136 = vmatprep.subr.bf16.mxu0 0
    %137 = vmatpush1.bf16.msra.mxu0 0
    %138 = vmatprep.subr.bf16.mxu0 0
    %139 = vmatpush1.bf16.msra.mxu0 0
    %140 = vmatprep.subr.bf16.mxu0 0
    %141 = vmatpush1.bf16.msra.mxu0 0
    %142 = vmatprep.mubr.bf16.mxu0 0
    %143 = vmatmul.mubr.bf16.gmra.mrb[0].mxu0 %v108
    %v144 = vpop.f32.mrb[0].mxu0
    %v145 = vadd.f32 %v92, %v144
    %v146 = vpop.f32.mrb[0].mxu0
    %v147 = vpop.f32.mrb[0].mxu0
    %v148 = vpop.f32.mrb[0].mxu0
    %149 = vdwg.mxu0
    %v150 = vmax.f32 %v145, 0.0
    %v151 = vpack.c.bf16 %v150, %v150
    %v152 = vld [vmem:[#allocation7] sm:$0xf]
    %v153 = vld [vmem:[#allocation7 + $0x4] sm:$0xf]
    %v154 = vld [vmem:[#allocation7 + $0x8] sm:$0xf]
    %v155 = vld [vmem:[#allocation7 + $0xc] sm:$0xf]
    %v156 = vld [vmem:[#allocation7 + $0x10] sm:$0xf]
    %v157 = vld [vmem:[#allocation7 + $0x14] sm:$0xf]
    %v158 = vld [vmem:[#allocation7 + $0x18] sm:$0xf]
    %v159 = vld [vmem:[#allocation7 + $0x1c] sm:$0xf]
    %v160 = vld [vmem:[#allocation7 + $0x20] sm:$0xf]
    %v161 = vld [vmem:[#allocation7 + $0x24] sm:$0xf]
    %v162 = vld [vmem:[#allocation7 + $0x28] sm:$0xf]
    %v163 = vld [vmem:[#allocation7 + $0x2c] sm:$0xf]
    %v164 = vld [vmem:[#allocation7 + $0x30] sm:$0xf]
    %v165 = vld [vmem:[#allocation7 + $0x34] sm:$0xf]
    %v166 = vld [vmem:[#allocation7 + $0x38] sm:$0xf]
    %v167 = vld [vmem:[#allocation7 + $0x3c] sm:$0xf]
    %v168 = vld [vmem:[%s4] sm:$0x1]
    %v170 = vlaneseq
    %v171 = vshrl.u32 %v170, 7
    %v172 = vsub.s32 0, %v171
    %v173 = vrot.slane %v168, %v172
    %v191 = vunpack.c.l.b16 %v152
    %v192 = vunpack.c.l.b16 %v153
    %v193 = vunpack.c.l.b16 %v154
    %v194 = vunpack.c.l.b16 %v155
    %v195 = vunpack.c.l.b16 %v156
    %v196 = vunpack.c.l.b16 %v157
    %v197 = vunpack.c.l.b16 %v158
    %v198 = vunpack.c.l.b16 %v159
    %v199 = vunpack.c.l.b16 %v160
    %v200 = vunpack.c.l.b16 %v161
    %v201 = vunpack.c.l.b16 %v162
    %v202 = vunpack.c.l.b16 %v163
    %v203 = vunpack.c.l.b16 %v164
    %v204 = vunpack.c.l.b16 %v165
    %v205 = vunpack.c.l.b16 %v166
    %v206 = vunpack.c.l.b16 %v167
    %v207 = vpack.c.b16 %v192, %v191
    %v208 = vpack.c.b16 %v194, %v193
    %v209 = vpack.c.b16 %v196, %v195
    %v210 = vpack.c.b16 %v198, %v197
    %v211 = vpack.c.b16 %v200, %v199
    %v212 = vpack.c.b16 %v202, %v201
    %v213 = vpack.c.b16 %v204, %v203
    %v214 = vpack.c.b16 %v206, %v205
    %223 = vmatprep.subr.bf16.mxu0 0
    %224 = vmatpush1.bf16.msra.mxu0 %v207
    %225 = vmatprep.subr.bf16.mxu0 0
    %226 = vmatpush1.bf16.msra.mxu0 %v208
    %227 = vmatprep.subr.bf16.mxu0 0
    %228 = vmatpush1.bf16.msra.mxu0 %v209
    %229 = vmatprep.subr.bf16.mxu0 0
    %230 = vmatpush1.bf16.msra.mxu0 %v210
    %231 = vmatprep.subr.bf16.mxu0 0
    %232 = vmatpush1.bf16.msra.mxu0 %v211
    %233 = vmatprep.subr.bf16.mxu0 0
    %234 = vmatpush1.bf16.msra.mxu0 %v212
    %235 = vmatprep.subr.bf16.mxu0 0
    %236 = vmatpush1.bf16.msra.mxu0 %v213
    %237 = vmatprep.subr.bf16.mxu0 0
    %238 = vmatpush1.bf16.msra.mxu0 %v214
    %239 = vmatprep.subr.bf16.mxu0 0
    %240 = vmatpush1.bf16.msra.mxu0 0
    %241 = vmatprep.subr.bf16.mxu0 0
    %242 = vmatpush1.bf16.msra.mxu0 0
    %243 = vmatprep.subr.bf16.mxu0 0
    %244 = vmatpush1.bf16.msra.mxu0 0
    %245 = vmatprep.subr.bf16.mxu0 0
    %246 = vmatpush1.bf16.msra.mxu0 0
    %247 = vmatprep.subr.bf16.mxu0 0
    %248 = vmatpush1.bf16.msra.mxu0 0
    %249 = vmatprep.subr.bf16.mxu0 0
    %250 = vmatpush1.bf16.msra.mxu0 0
    %251 = vmatprep.subr.bf16.mxu0 0
    %252 = vmatpush1.bf16.msra.mxu0 0
    %253 = vmatprep.subr.bf16.mxu0 0
    %254 = vmatpush1.bf16.msra.mxu0 0
    %255 = vmatprep.mubr.bf16.mxu0 0
    %256 = vmatmul.mubr.bf16.gmra.mrb[0].mxu0 %v151
    %v257 = vpop.f32.mrb[0].mxu0
    %v258 = vadd.f32 %v173, %v257
    %v259 = vpop.f32.mrb[0].mxu0
    %v260 = vpop.f32.mrb[0].mxu0
    %v261 = vpop.f32.mrb[0].mxu0
    %262 = vdwg.mxu0
    %v263 = vmax.f32 %v258, 0.0
    %v264 = vpack.c.bf16 %v263, %v263
    %v265 = vld [vmem:[#allocation8] sm:$0xf]
    %v266 = vld [vmem:[#allocation8 + $0x4] sm:$0xf]
    %v267 = vld [vmem:[#allocation8 + $0x8] sm:$0xf]
    %v268 = vld [vmem:[#allocation8 + $0xc] sm:$0xf]
    %v269 = vld [vmem:[#allocation8 + $0x10] sm:$0xf]
    %v270 = vld [vmem:[#allocation8 + $0x14] sm:$0xf]
    %v271 = vld [vmem:[#allocation8 + $0x18] sm:$0xf]
    %v272 = vld [vmem:[#allocation8 + $0x1c] sm:$0xf]
    %v273 = vld [vmem:[#allocation8 + $0x20] sm:$0xf]
    %v274 = vld [vmem:[#allocation8 + $0x24] sm:$0xf]
    %v275 = vld [vmem:[#allocation8 + $0x28] sm:$0xf]
    %v276 = vld [vmem:[#allocation8 + $0x2c] sm:$0xf]
    %v277 = vld [vmem:[#allocation8 + $0x30] sm:$0xf]
    %v278 = vld [vmem:[#allocation8 + $0x34] sm:$0xf]
    %v279 = vld [vmem:[#allocation8 + $0x38] sm:$0xf]
    %v280 = vld [vmem:[#allocation8 + $0x3c] sm:$0xf]
    %v281 = vld [vmem:[%s6] sm:$0x1]
    %v283 = vlaneseq
    %v284 = vshrl.u32 %v283, 7
    %v285 = vsub.s32 0, %v284
    %v286 = vrot.slane %v281, %v285
    %v304 = vunpack.c.l.b16 %v265
    %v305 = vunpack.c.l.b16 %v266
    %v306 = vunpack.c.l.b16 %v267
    %v307 = vunpack.c.l.b16 %v268
    %v308 = vunpack.c.l.b16 %v269
    %v309 = vunpack.c.l.b16 %v270
    %v310 = vunpack.c.l.b16 %v271
    %v311 = vunpack.c.l.b16 %v272
    %v312 = vunpack.c.l.b16 %v273
    %v313 = vunpack.c.l.b16 %v274
    %v314 = vunpack.c.l.b16 %v275
    %v315 = vunpack.c.l.b16 %v276
    %v316 = vunpack.c.l.b16 %v277
    %v317 = vunpack.c.l.b16 %v278
    %v318 = vunpack.c.l.b16 %v279
    %v319 = vunpack.c.l.b16 %v280
    %v320 = vpack.c.b16 %v305, %v304
    %v321 = vpack.c.b16 %v307, %v306
    %v322 = vpack.c.b16 %v309, %v308
    %v323 = vpack.c.b16 %v311, %v310
    %v324 = vpack.c.b16 %v313, %v312
    %v325 = vpack.c.b16 %v315, %v314
    %v326 = vpack.c.b16 %v317, %v316
    %v327 = vpack.c.b16 %v319, %v318
    %336 = vmatprep.subr.bf16.mxu0 0
    %337 = vmatpush1.bf16.msra.mxu0 %v320
    %338 = vmatprep.subr.bf16.mxu0 0
    %339 = vmatpush1.bf16.msra.mxu0 %v321
    %340 = vmatprep.subr.bf16.mxu0 0
    %341 = vmatpush1.bf16.msra.mxu0 %v322
    %342 = vmatprep.subr.bf16.mxu0 0
    %343 = vmatpush1.bf16.msra.mxu0 %v323
    %344 = vmatprep.subr.bf16.mxu0 0
    %345 = vmatpush1.bf16.msra.mxu0 %v324
    %346 = vmatprep.subr.bf16.mxu0 0
    %347 = vmatpush1.bf16.msra.mxu0 %v325
    %348 = vmatprep.subr.bf16.mxu0 0
    %349 = vmatpush1.bf16.msra.mxu0 %v326
    %350 = vmatprep.subr.bf16.mxu0 0
    %351 = vmatpush1.bf16.msra.mxu0 %v327
    %352 = vmatprep.subr.bf16.mxu0 0
    %353 = vmatpush1.bf16.msra.mxu0 0
    %354 = vmatprep.subr.bf16.mxu0 0
    %355 = vmatpush1.bf16.msra.mxu0 0
    %356 = vmatprep.subr.bf16.mxu0 0
    %357 = vmatpush1.bf16.msra.mxu0 0
    %358 = vmatprep.subr.bf16.mxu0 0
    %359 = vmatpush1.bf16.msra.mxu0 0
    %360 = vmatprep.subr.bf16.mxu0 0
    %361 = vmatpush1.bf16.msra.mxu0 0
    %362 = vmatprep.subr.bf16.mxu0 0
    %363 = vmatpush1.bf16.msra.mxu0 0
    %364 = vmatprep.subr.bf16.mxu0 0
    %365 = vmatpush1.bf16.msra.mxu0 0
    %366 = vmatprep.subr.bf16.mxu0 0
    %367 = vmatpush1.bf16.msra.mxu0 0
    %368 = vmatprep.mubr.bf16.mxu0 0
    %369 = vmatmul.mubr.bf16.gmra.mrb[0].mxu0 %v264
    %v370 = vpop.f32.mrb[0].mxu0
    %v371 = vadd.f32 %v286, %v370
    %v372 = vpop.f32.mrb[0].mxu0
    %v373 = vpop.f32.mrb[0].mxu0
    %v374 = vpop.f32.mrb[0].mxu0
    %375 = vdwg.mxu0
    %v376 = vlaneseq
    %v377 = vand.u32 %v376, 127
    %vm378 = vcmp.lt.s32.totalorder %v377, 8
    %vm379 = vcmp.eq.s32.totalorder %v377, 8
    %v380 = vsel %vm378, %v371, -1e+30
    %381 = vmax.xlane.f32.xlu0 %v380
    %v382 = vpop.xlane.xlu0 %381
    %v383 = vsub.f32 %v380, %v382
    %v384 = vmul.f32 %v383, 1.442695
    %v385 = vpow.pop %v384
    %386 = vadd.xlane.f32.xlu0 %v385
    %v387 = vpop.xlane.xlu0 %386
    %v388 = vrcp.pop %v387
    %v389 = vmul.f32 %v385, %v388
    %v390 = vsel %vm379, %v371, 0.0
    %v391 = vadd.f32 %v389, %v390
    %392 = vst [vmem:[#allocation10] sm:$0xff] %v391
    // Predicated region
    $region46: #{tpu_custom_call.1} parent=1 // pred_check
      _
    $region47: #{tpu_custom_call.1} parent=1 // pred_check_branch
      %394 = sbr.rel (0) target = $region49
    $region48: #{tpu_custom_call.1} parent=1 // pred_region
      %s396 = ssub.s32 128, 128
      %397 = vsyncadd [#allocation4], %s396
      %s399 = sshll.u32 [#allocation10], 4
      %s400 = int_to_ptr.vmem [resolvable:$true] %s399
      %402 = dma.vmem_to_hbm [thread:$0]  %s400, 128, %s7, [#allocation4]
    $region49: #{tpu_custom_call.1} parent=1 // pred_fallthru
      _
    // Predicated region
    $region50: #{tpu_custom_call.1} parent=1 // pred_check
      _
    $region51: #{tpu_custom_call.1} parent=1 // pred_check_branch
      %404 = sbr.rel (0) target = $region53
    $region52: #{tpu_custom_call.1} parent=1 // pred_region
      %405 = dma.done [#allocation4], 128
    $region53: #{tpu_custom_call.1} parent=1 // pred_fallthru
      _
    %406 = vsyncpa [#allocation3], 1
    %407 = vsyncpa [#allocation6], 1
    %408 = vsyncpa [#allocation9], 1
    %409 = vsyncpa [#allocation4], 1

// kernel: tpu_custom_call.1
$region0: #{tpu_custom_call.1}
  #allocation0 [shape = 'u32[]', space=smem, size = 0x4, offset = 0x4, fixed_abs, tag = 'smem constant byte address 0x4 - core index']
  #allocation1 [shape = 'u32[144,128]{1,0:T(1,128)}', space=vmem, size = 0x12000, scoped, tag = 'internal scratch']
  %s0 = inlined_call_operand.hbm [shape: f32[8,32], index: 0, kind: input, shape index: {}]
  %s1 = inlined_call_operand.hbm [shape: bf16[32,128], index: 1, kind: input, shape index: {}]
  %s2 = inlined_call_operand.vmem [shape: f32[1,128], index: 2, kind: input, shape index: {}]
  %s3 = inlined_call_operand.hbm [shape: bf16[128,128], index: 3, kind: input, shape index: {}]
  %s4 = inlined_call_operand.vmem [shape: f32[1,128], index: 4, kind: input, shape index: {}]
  %s5 = inlined_call_operand.hbm [shape: bf16[128,128], index: 5, kind: input, shape index: {}]
  %s6 = inlined_call_operand.vmem [shape: f32[1,128], index: 6, kind: input, shape index: {}]
  %s7 = inlined_call_operand.hbm [shape: f32[8,128], index: 7, kind: output, shape index: {}]
  %s8 = sld [smem:[#allocation0]]
  $region54: #{tpu_custom_call.1} parent=0
    _
  %s10 = ssub.s32 1, %s8
  %s11 = scalar_select 0, %s10, %s8
  $region1: #{tpu_custom_call.1} parent=0
    #allocation2 [shape = 'u8[4096]{0}', space=vmem, size = 0x1000, scoped, tag = 'input window, operand 0, single buffered']
    #allocation3 [shape = 's32[1]{0}', space=sflag, size = 0x4, scoped, tag = 'scoped memory for tpu_custom_call.1']
    #allocation4 [shape = 's32[1]{0}', space=sflag, size = 0x4, scoped, tag = 'scoped memory for tpu_custom_call.1']
    #allocation5 [shape = 'u8[8192]{0}', space=vmem, size = 0x2000, scoped, tag = 'input window, operand 1, single buffered']
    #allocation6 [shape = 's32[1]{0}', space=sflag, size = 0x4, scoped, tag = 'scoped memory for tpu_custom_call.1']
    #allocation7 [shape = 'u8[32768]{0}', space=vmem, size = 0x8000, scoped, tag = 'input window, operand 3, single buffered']
    #allocation8 [shape = 'u8[32768]{0}', space=vmem, size = 0x8000, scoped, tag = 'input window, operand 5, single buffered']
    #allocation9 [shape = 's32[1]{0}', space=sflag, size = 0x4, scoped, tag = 'scoped memory for tpu_custom_call.1']
    #allocation10 [shape = 'u8[4096]{0}', space=vmem, size = 0x1000, scoped, tag = 'output window, operand 0, single buffered']
    %12 = vsyncpa [#allocation3], 0
    %13 = vsyncpa [#allocation6], 0
    %14 = vsyncpa [#allocation9], 0
    %15 = vsyncpa [#allocation4], 0
    // Predicated region
    $region2: #{tpu_custom_call.1} parent=1 // pred_check
      _
    $region3: #{tpu_custom_call.1} parent=1 // pred_check_branch
      %17 = sbr.rel (0) target = $region5
    $region4: #{tpu_custom_call.1} parent=1 // pred_region
      %s19 = ssub.s32 128, 128
      %20 = vsyncadd [#allocation3], %s19
      %s22 = sshll.u32 [#allocation2], 4
      %s23 = int_to_ptr.vmem [resolvable:$true] %s22
      %25 = dma.hbm_to_vmem [thread:$0]  %s0, 128, %s23, [#allocation3]
    $region5: #{tpu_custom_call.1} parent=1 // pred_fallthru
      _
    // Predicated region
    $region6: #{tpu_custom_call.1} parent=1 // pred_check
      _
    $region7: #{tpu_custom_call.1} parent=1 // pred_check_branch
      %27 = sbr.rel (0) target = $region9
    $region8: #{tpu_custom_call.1} parent=1 // pred_region
      %s29 = ssub.s32 256, 256
      %30 = vsyncadd [#allocation6], %s29
      %s31 = sshll.u32 [#allocation5], 4
      %s32 = int_to_ptr.vmem [resolvable:$true] %s31
      %37 = dma.hbm_to_vmem [thread:$0]  %s1, 256, %s32, [#allocation6], 64, 64, 4
    $region9: #{tpu_custom_call.1} parent=1 // pred_fallthru
      _
    // Predicated region
    $region10: #{tpu_custom_call.1} parent=1 // pred_check
      _
    $region11: #{tpu_custom_call.1} parent=1 // pred_check_branch
      %39 = sbr.rel (0) target = $region13
    $region12: #{tpu_custom_call.1} parent=1 // pred_region
      _
    $region13: #{tpu_custom_call.1} parent=1 // pred_fallthru
      _
    // Predicated region
    $region14: #{tpu_custom_call.1} parent=1 // pred_check
      _
    $region15: #{tpu_custom_call.1} parent=1 // pred_check_branch
      %41 = sbr.rel (0) target = $region17
    $region16: #{tpu_custom_call.1} parent=1 // pred_region
      %s43 = ssub.s32 1024, 1024
      %44 = vsyncadd [#allocation6], %s43
      %s45 = sshll.u32 [#allocation7], 4
      %s46 = int_to_ptr.vmem [resolvable:$true] %s45
      %51 = dma.hbm_to_vmem [thread:$0]  %s3, 1024, %s46, [#allocation6], 64, 64, 4
    $region17: #{tpu_custom_call.1} parent=1 // pred_fallthru
      _
    // Predicated region
    $region18: #{tpu_custom_call.1} parent=1 // pred_check
      _
    $region19: #{tpu_custom_call.1} parent=1 // pred_check_branch
      %53 = sbr.rel (0) target = $region21
    $region20: #{tpu_custom_call.1} parent=1 // pred_region
      _
    $region21: #{tpu_custom_call.1} parent=1 // pred_fallthru
      _
    // Predicated region
    $region22: #{tpu_custom_call.1} parent=1 // pred_check
      _
    $region23: #{tpu_custom_call.1} parent=1 // pred_check_branch
      %55 = sbr.rel (0) target = $region25
    $region24: #{tpu_custom_call.1} parent=1 // pred_region
      %s57 = ssub.s32 1024, 1024
      %58 = vsyncadd [#allocation9], %s57
      %s59 = sshll.u32 [#allocation8], 4
      %s60 = int_to_ptr.vmem [resolvable:$true] %s59
      %65 = dma.hbm_to_vmem [thread:$0]  %s5, 1024, %s60, [#allocation9], 64, 64, 4
    $region25: #{tpu_custom_call.1} parent=1 // pred_fallthru
      _
    // Predicated region
    $region26: #{tpu_custom_call.1} parent=1 // pred_check
      _
    $region27: #{tpu_custom_call.1} parent=1 // pred_check_branch
      %67 = sbr.rel (0) target = $region29
    $region28: #{tpu_custom_call.1} parent=1 // pred_region
      _
    $region29: #{tpu_custom_call.1} parent=1 // pred_fallthru
      _
    // Predicated region
    $region30: #{tpu_custom_call.1} parent=1 // pred_check
      _
    $region31: #{tpu_custom_call.1} parent=1 // pred_check_branch
      %69 = sbr.rel (0) target = $region33
    $region32: #{tpu_custom_call.1} parent=1 // pred_region
      %70 = dma.done [#allocation3], 128
    $region33: #{tpu_custom_call.1} parent=1 // pred_fallthru
      _
    // Predicated region
    $region34: #{tpu_custom_call.1} parent=1 // pred_check
      _
    $region35: #{tpu_custom_call.1} parent=1 // pred_check_branch
      %72 = sbr.rel (0) target = $region37
    $region36: #{tpu_custom_call.1} parent=1 // pred_region
      %73 = dma.done [#allocation6], 256
    $region37: #{tpu_custom_call.1} parent=1 // pred_fallthru
      _
    // Predicated region
    $region38: #{tpu_custom_call.1} parent=1 // pred_check
      _
    $region39: #{tpu_custom_call.1} parent=1 // pred_check_branch
      %75 = sbr.rel (0) target = $region41
    $region40: #{tpu_custom_call.1} parent=1 // pred_region
      %76 = dma.done [#allocation6], 1024
    $region41: #{tpu_custom_call.1} parent=1 // pred_fallthru
      _
    // Predicated region
    $region42: #{tpu_custom_call.1} parent=1 // pred_check
      _
    $region43: #{tpu_custom_call.1} parent=1 // pred_check_branch
      %78 = sbr.rel (0) target = $region45
    $region44: #{tpu_custom_call.1} parent=1 // pred_region
      %79 = dma.done [#allocation9], 1024
    $region45: #{tpu_custom_call.1} parent=1 // pred_fallthru
      _
    %v81 = vld [vmem:[#allocation2] sm:$0xff]
    %v82 = vpack.c.bf16 %v81, %v81
    %v83 = vld [vmem:[#allocation5] sm:$0xf]
    %v84 = vld [vmem:[#allocation5 + $0x4] sm:$0xf]
    %v85 = vld [vmem:[#allocation5 + $0x8] sm:$0xf]
    %v86 = vld [vmem:[#allocation5 + $0xc] sm:$0xf]
    %v87 = vld [vmem:[%s2] sm:$0x1]
    %v89 = vlaneseq
    %v90 = vshrl.u32 %v89, 7
    %v91 = vsub.s32 0, %v90
    %v92 = vrot.slane %v87, %v91
    %v98 = vunpack.c.l.b16 %v83
    %v99 = vunpack.c.l.b16 %v84
    %v100 = vunpack.c.l.b16 %v85
    %v101 = vunpack.c.l.b16 %v86
    %v102 = vpack.c.b16 %v99, %v98
    %v103 = vpack.c.b16 %v101, %v100
    %vm106 = vcmask 261120
    %v108 = vsel %vm106, %v82, 0
    %110 = vmatprep.subr.bf16.mxu0 0
    %111 = vmatpush1.bf16.msra.mxu0 %v102
    %112 = vmatprep.subr.bf16.mxu0 0
    %113 = vmatpush1.bf16.msra.mxu0 %v103
    %114 = vmatprep.subr.bf16.mxu0 0
    %115 = vmatpush1.bf16.msra.mxu0 0
    %116 = vmatprep.subr.bf16.mxu0 0
    %117 = vmatpush1.bf16.msra.mxu0 0
    %118 = vmatprep.subr.bf16.mxu0 0
    %119 = vmatpush1.bf16.msra.mxu0 0
    %120 = vmatprep.subr.bf16.mxu0 0
    %121 = vmatpush1.bf16.msra.mxu0 0
    %122 = vmatprep.subr.bf16.mxu0 0
    %123 = vmatpush1.bf16.msra.mxu0 0
    %124 = vmatprep.subr.bf16.mxu0 0
    %125 = vmatpush1.bf16.msra.mxu0 0
    %126 = vmatprep.subr.bf16.mxu0 0
    %127 = vmatpush1.bf16.msra.mxu0 0
    %128 = vmatprep.subr.bf16.mxu0 0
    %129 = vmatpush1.bf16.msra.mxu0 0
    %130 = vmatprep.subr.bf16.mxu0 0
    %131 = vmatpush1.bf16.msra.mxu0 0
    %132 = vmatprep.subr.bf16.mxu0 0
    %133 = vmatpush1.bf16.msra.mxu0 0
    %134 = vmatprep.subr.bf16.mxu0 0
    %135 = vmatpush1.bf16.msra.mxu0 0
    %136 = vmatprep.subr.bf16.mxu0 0
    %137 = vmatpush1.bf16.msra.mxu0 0
    %138 = vmatprep.subr.bf16.mxu0 0
    %139 = vmatpush1.bf16.msra.mxu0 0
    %140 = vmatprep.subr.bf16.mxu0 0
    %141 = vmatpush1.bf16.msra.mxu0 0
    %142 = vmatprep.mubr.bf16.mxu0 0
    %143 = vmatmul.mubr.bf16.gmra.mrb[0].mxu0 %v108
    %v144 = vpop.f32.mrb[0].mxu0
    %v145 = vadd.f32 %v92, %v144
    %v146 = vpop.f32.mrb[0].mxu0
    %v147 = vpop.f32.mrb[0].mxu0
    %v148 = vpop.f32.mrb[0].mxu0
    %149 = vdwg.mxu0
    %v150 = vmax.f32 %v145, 0.0
    %v151 = vpack.c.bf16 %v150, %v150
    %v152 = vld [vmem:[#allocation7] sm:$0xf]
    %v153 = vld [vmem:[#allocation7 + $0x4] sm:$0xf]
    %v154 = vld [vmem:[#allocation7 + $0x8] sm:$0xf]
    %v155 = vld [vmem:[#allocation7 + $0xc] sm:$0xf]
    %v156 = vld [vmem:[#allocation7 + $0x10] sm:$0xf]
    %v157 = vld [vmem:[#allocation7 + $0x14] sm:$0xf]
    %v158 = vld [vmem:[#allocation7 + $0x18] sm:$0xf]
    %v159 = vld [vmem:[#allocation7 + $0x1c] sm:$0xf]
    %v160 = vld [vmem:[#allocation7 + $0x20] sm:$0xf]
    %v161 = vld [vmem:[#allocation7 + $0x24] sm:$0xf]
    %v162 = vld [vmem:[#allocation7 + $0x28] sm:$0xf]
    %v163 = vld [vmem:[#allocation7 + $0x2c] sm:$0xf]
    %v164 = vld [vmem:[#allocation7 + $0x30] sm:$0xf]
    %v165 = vld [vmem:[#allocation7 + $0x34] sm:$0xf]
    %v166 = vld [vmem:[#allocation7 + $0x38] sm:$0xf]
    %v167 = vld [vmem:[#allocation7 + $0x3c] sm:$0xf]
    %v168 = vld [vmem:[%s4] sm:$0x1]
    %v170 = vlaneseq
    %v171 = vshrl.u32 %v170, 7
    %v172 = vsub.s32 0, %v171
    %v173 = vrot.slane %v168, %v172
    %v191 = vunpack.c.l.b16 %v152
    %v192 = vunpack.c.l.b16 %v153
    %v193 = vunpack.c.l.b16 %v154
    %v194 = vunpack.c.l.b16 %v155
    %v195 = vunpack.c.l.b16 %v156
    %v196 = vunpack.c.l.b16 %v157
    %v197 = vunpack.c.l.b16 %v158
    %v198 = vunpack.c.l.b16 %v159
    %v199 = vunpack.c.l.b16 %v160
    %v200 = vunpack.c.l.b16 %v161
    %v201 = vunpack.c.l.b16 %v162
    %v202 = vunpack.c.l.b16 %v163
    %v203 = vunpack.c.l.b16 %v164
    %v204 = vunpack.c.l.b16 %v165
    %v205 = vunpack.c.l.b16 %v166
    %v206 = vunpack.c.l.b16 %v167
    %v207 = vpack.c.b16 %v192, %v191
    %v208 = vpack.c.b16 %v194, %v193
    %v209 = vpack.c.b16 %v196, %v195
    %v210 = vpack.c.b16 %v198, %v197
    %v211 = vpack.c.b16 %v200, %v199
    %v212 = vpack.c.b16 %v202, %v201
    %v213 = vpack.c.b16 %v204, %v203
    %v214 = vpack.c.b16 %v206, %v205
    %223 = vmatprep.subr.bf16.mxu0 0
    %224 = vmatpush1.bf16.msra.mxu0 %v207
    %225 = vmatprep.subr.bf16.mxu0 0
    %226 = vmatpush1.bf16.msra.mxu0 %v208
    %227 = vmatprep.subr.bf16.mxu0 0
    %228 = vmatpush1.bf16.msra.mxu0 %v209
    %229 = vmatprep.subr.bf16.mxu0 0
    %230 = vmatpush1.bf16.msra.mxu0 %v210
    %231 = vmatprep.subr.bf16.mxu0 0
    %232 = vmatpush1.bf16.msra.mxu0 %v211
    %233 = vmatprep.subr.bf16.mxu0 0
    %234 = vmatpush1.bf16.msra.mxu0 %v212
    %235 = vmatprep.subr.bf16.mxu0 0
    %236 = vmatpush1.bf16.msra.mxu0 %v213
    %237 = vmatprep.subr.bf16.mxu0 0
    %238 = vmatpush1.bf16.msra.mxu0 %v214
    %239 = vmatprep.subr.bf16.mxu0 0
    %240 = vmatpush1.bf16.msra.mxu0 0
    %241 = vmatprep.subr.bf16.mxu0 0
    %242 = vmatpush1.bf16.msra.mxu0 0
    %243 = vmatprep.subr.bf16.mxu0 0
    %244 = vmatpush1.bf16.msra.mxu0 0
    %245 = vmatprep.subr.bf16.mxu0 0
    %246 = vmatpush1.bf16.msra.mxu0 0
    %247 = vmatprep.subr.bf16.mxu0 0
    %248 = vmatpush1.bf16.msra.mxu0 0
    %249 = vmatprep.subr.bf16.mxu0 0
    %250 = vmatpush1.bf16.msra.mxu0 0
    %251 = vmatprep.subr.bf16.mxu0 0
    %252 = vmatpush1.bf16.msra.mxu0 0
    %253 = vmatprep.subr.bf16.mxu0 0
    %254 = vmatpush1.bf16.msra.mxu0 0
    %255 = vmatprep.mubr.bf16.mxu0 0
    %256 = vmatmul.mubr.bf16.gmra.mrb[0].mxu0 %v151
    %v257 = vpop.f32.mrb[0].mxu0
    %v258 = vadd.f32 %v173, %v257
    %v259 = vpop.f32.mrb[0].mxu0
    %v260 = vpop.f32.mrb[0].mxu0
    %v261 = vpop.f32.mrb[0].mxu0
    %262 = vdwg.mxu0
    %v263 = vmax.f32 %v258, 0.0
    %v264 = vpack.c.bf16 %v263, %v263
    %v265 = vld [vmem:[#allocation8] sm:$0xf]
    %v266 = vld [vmem:[#allocation8 + $0x4] sm:$0xf]
    %v267 = vld [vmem:[#allocation8 + $0x8] sm:$0xf]
    %v268 = vld [vmem:[#allocation8 + $0xc] sm:$0xf]
    %v269 = vld [vmem:[#allocation8 + $0x10] sm:$0xf]
    %v270 = vld [vmem:[#allocation8 + $0x14] sm:$0xf]
    %v271 = vld [vmem:[#allocation8 + $0x18] sm:$0xf]
    %v272 = vld [vmem:[#allocation8 + $0x1c] sm:$0xf]
    %v273 = vld [vmem:[#allocation8 + $0x20] sm:$0xf]
    %v274 = vld [vmem:[#allocation8 + $0x24] sm:$0xf]
    %v275 = vld [vmem:[#allocation8 + $0x28] sm:$0xf]
    %v276 = vld [vmem:[#allocation8 + $0x2c] sm:$0xf]
    %v277 = vld [vmem:[#allocation8 + $0x30] sm:$0xf]
    %v278 = vld [vmem:[#allocation8 + $0x34] sm:$0xf]
    %v279 = vld [vmem:[#allocation8 + $0x38] sm:$0xf]
    %v280 = vld [vmem:[#allocation8 + $0x3c] sm:$0xf]
    %v281 = vld [vmem:[%s6] sm:$0x1]
    %v283 = vlaneseq
    %v284 = vshrl.u32 %v283, 7
    %v285 = vsub.s32 0, %v284
    %v286 = vrot.slane %v281, %v285
    %v304 = vunpack.c.l.b16 %v265
    %v305 = vunpack.c.l.b16 %v266
    %v306 = vunpack.c.l.b16 %v267
    %v307 = vunpack.c.l.b16 %v268
    %v308 = vunpack.c.l.b16 %v269
    %v309 = vunpack.c.l.b16 %v270
    %v310 = vunpack.c.l.b16 %v271
    %v311 = vunpack.c.l.b16 %v272
    %v312 = vunpack.c.l.b16 %v273
    %v313 = vunpack.c.l.b16 %v274
    %v314 = vunpack.c.l.b16 %v275
    %v315 = vunpack.c.l.b16 %v276
    %v316 = vunpack.c.l.b16 %v277
    %v317 = vunpack.c.l.b16 %v278
    %v318 = vunpack.c.l.b16 %v279
    %v319 = vunpack.c.l.b16 %v280
    %v320 = vpack.c.b16 %v305, %v304
    %v321 = vpack.c.b16 %v307, %v306
    %v322 = vpack.c.b16 %v309, %v308
    %v323 = vpack.c.b16 %v311, %v310
    %v324 = vpack.c.b16 %v313, %v312
    %v325 = vpack.c.b16 %v315, %v314
    %v326 = vpack.c.b16 %v317, %v316
    %v327 = vpack.c.b16 %v319, %v318
    %336 = vmatprep.subr.bf16.mxu0 0
    %337 = vmatpush1.bf16.msra.mxu0 %v320
    %338 = vmatprep.subr.bf16.mxu0 0
    %339 = vmatpush1.bf16.msra.mxu0 %v321
    %340 = vmatprep.subr.bf16.mxu0 0
    %341 = vmatpush1.bf16.msra.mxu0 %v322
    %342 = vmatprep.subr.bf16.mxu0 0
    %343 = vmatpush1.bf16.msra.mxu0 %v323
    %344 = vmatprep.subr.bf16.mxu0 0
    %345 = vmatpush1.bf16.msra.mxu0 %v324
    %346 = vmatprep.subr.bf16.mxu0 0
    %347 = vmatpush1.bf16.msra.mxu0 %v325
    %348 = vmatprep.subr.bf16.mxu0 0
    %349 = vmatpush1.bf16.msra.mxu0 %v326
    %350 = vmatprep.subr.bf16.mxu0 0
    %351 = vmatpush1.bf16.msra.mxu0 %v327
    %352 = vmatprep.subr.bf16.mxu0 0
    %353 = vmatpush1.bf16.msra.mxu0 0
    %354 = vmatprep.subr.bf16.mxu0 0
    %355 = vmatpush1.bf16.msra.mxu0 0
    %356 = vmatprep.subr.bf16.mxu0 0
    %357 = vmatpush1.bf16.msra.mxu0 0
    %358 = vmatprep.subr.bf16.mxu0 0
    %359 = vmatpush1.bf16.msra.mxu0 0
    %360 = vmatprep.subr.bf16.mxu0 0
    %361 = vmatpush1.bf16.msra.mxu0 0
    %362 = vmatprep.subr.bf16.mxu0 0
    %363 = vmatpush1.bf16.msra.mxu0 0
    %364 = vmatprep.subr.bf16.mxu0 0
    %365 = vmatpush1.bf16.msra.mxu0 0
    %366 = vmatprep.subr.bf16.mxu0 0
    %367 = vmatpush1.bf16.msra.mxu0 0
    %368 = vmatprep.mubr.bf16.mxu0 0
    %369 = vmatmul.mubr.bf16.gmra.mrb[0].mxu0 %v264
    %v370 = vpop.f32.mrb[0].mxu0
    %v371 = vadd.f32 %v286, %v370
    %v372 = vpop.f32.mrb[0].mxu0
    %v373 = vpop.f32.mrb[0].mxu0
    %v374 = vpop.f32.mrb[0].mxu0
    %375 = vdwg.mxu0
    %v376 = vlaneseq
    %v377 = vand.u32 %v376, 127
    %vm378 = vcmp.lt.s32.totalorder %v377, 8
    %vm379 = vcmp.eq.s32.totalorder %v377, 8
    %v380 = vsel %vm378, %v371, -1e+30
    %381 = vmax.xlane.f32.xlu0 %v380
    %v382 = vpop.xlane.xlu0 %381
    %v383 = vsub.f32 %v380, %v382
    %v384 = vmul.f32 %v383, 1.442695
    %v385 = vpow.pop %v384
    %386 = vadd.xlane.f32.xlu0 %v385
    %v387 = vpop.xlane.xlu0 %386
    %v388 = vrcp.pop %v387
    %v389 = vmul.f32 %v385, %v388
    %v390 = vsel %vm379, %v371, 0.0
    %v391 = vadd.f32 %v389, %v390
    %392 = vst [vmem:[#allocation10] sm:$0xff] %v391
    // Predicated region
    $region46: #{tpu_custom_call.1} parent=1 // pred_check
      _
    $region47: #{tpu_custom_call.1} parent=1 // pred_check_branch
      %394 = sbr.rel (0) target = $region49
    $region48: #{tpu_custom_call.1} parent=1 // pred_region
      %s396 = ssub.s32 128, 128
      %397 = vsyncadd [#allocation4], %s396
      %s399 = sshll.u32 [#allocation10], 4
      %s400 = int_to_ptr.vmem [resolvable:$true] %s399
      %402 = dma.vmem_to_hbm [thread:$0]  %s400, 128, %s7, [#allocation4]
    $region49: #{tpu_custom_call.1} parent=1 // pred_fallthru
      _
    // Predicated region
    $region50: #{tpu_custom_call.1} parent=1 // pred_check
      _
    $region51: #{tpu_custom_call.1} parent=1 // pred_check_branch
      %404 = sbr.rel (0) target = $region53
    $region52: #{tpu_custom_call.1} parent=1 // pred_region
      %405 = dma.done [#allocation4], 128
    $region53: #{tpu_custom_call.1} parent=1 // pred_fallthru
      _
    %406 = vsyncpa [#allocation3], 1
    %407 = vsyncpa [#allocation6], 1
    %408 = vsyncpa [#allocation9], 1
    %409 = vsyncpa [#allocation4], 1

</llo_original>
